<compile_context>
chip_gen: v6e
topology: v6e:2x2x1
jax: 0.10.0
libtpu: 0.0.40
codegen_flags: <defaults>
</compile_context>

<pallas_src>
import jax
import jax.numpy as jnp
from jax.experimental import pallas as pl
from jax.experimental.pallas import tpu as pltpu

_LANE = 128
_SUBLANE = 8
_VMEM_BUDGET_BYTES = 24 * 1024 * 1024   # conservative: fits v5e/v6e/v7x scoped VMEM
_VMEM_LIMIT_BYTES = 32 * 1024 * 1024    # == v6e/v7x scoped default; safe on v5e
_XLA_FAST_PATH_BYTES = 64 * 1024        # tiny outputs: custom-call overhead dominates


def _round_up(x, m):
    return ((x + m - 1) // m) * m


def _padded_tile_bytes(rows, cols, itemsize):
    """VMEM bytes of one (rows, cols) block after (8, 128) layout padding."""
    return (_round_up(max(rows, 1), _SUBLANE)
            * _round_up(max(cols, 1), _LANE) * itemsize)


def _vmem_footprint(tm, N, K, out_rows, itemsize):
    """Double-buffered (pipelined) VMEM footprint of one grid step."""
    return 2 * (_padded_tile_bytes(tm, N, itemsize)
                + _padded_tile_bytes(tm, K, itemsize)
                + _padded_tile_bytes(out_rows, tm, itemsize))


def _pick_tm(M, N, K, itemsize, budget=_VMEM_BUDGET_BYTES):
    """Largest lane-dense column-tile width whose padded footprint fits VMEM."""
    out_rows = K + 2 * N
    if M <= _LANE:
        # Full-extent block: always a legal block shape, single grid step.
        if _vmem_footprint(M, N, K, out_rows, itemsize) <= budget:
            return M
        return None
    if M > 2 * _LANE:
        # Keep >= 2 grid steps so the "parallel" axis can shard across the two
        # v7x TensorCores (neutral on single-TC v5e/v6e).
        cap = _round_up(-(-M // 2), _LANE)
    else:
        cap = _round_up(M, _LANE)
    for tm in (4096, 3072, 2048, 1536, 1024, 768, 512, 384, 256, 128):
        if tm > cap:
            continue
        if _vmem_footprint(tm, N, K, out_rows, itemsize) <= budget:
            return tm
    return None  # even the smallest slab does not fit -> caller falls back to XLA


def _cat_transpose_kernel(x1_ref, x2_ref, o_ref):
    # Pure layout work: one XLU transpose per input tile, then a single dense
    # full-tile store of the concatenated column slab.
    x1t = jnp.transpose(x1_ref[...])        # (N, tm)  == x3 == x4 column tile
    x2t = jnp.transpose(x2_ref[...])        # (K, tm)  == x5       column tile
    o_ref[...] = jnp.concatenate([x2t, x1t, x1t], axis=0)


def _xla_cat_transpose(x1, x2):
    return jnp.concatenate([x2.T, x1.T, x1.T], axis=0)


def cat_transpose(x1, x2, *, tm=None, force_pallas=False):
    assert x1.ndim == 2 and x2.ndim == 2, "inputs must be 2-D"
    M, N = x1.shape
    M2, K = x2.shape
    assert M == M2, "x1 and x2 must share the leading (pre-transpose) dim"
    assert x1.dtype == x2.dtype, "inputs must share dtype"

    itemsize = jnp.dtype(x1.dtype).itemsize
    out_rows = K + 2 * N

    # Fast path: tiny problems are pure launch + per-step overhead in a
    # custom call; let XLA do the copy inline.
    if (not force_pallas and tm is None
            and M * out_rows * itemsize <= _XLA_FAST_PATH_BYTES):
        return _xla_cat_transpose(x1, x2)

    if tm is None:
        tm = _pick_tm(M, N, K, itemsize)
    if tm is None:
        # Huge N/K: even a 128-wide column slab overflows the VMEM budget.
        return _xla_cat_transpose(x1, x2)

    grid = (pl.cdiv(M, tm),)
    grid_spec = pl.GridSpec(
        grid=grid,
        in_specs=[
            pl.BlockSpec((tm, N), lambda i: (i, 0)),      # x1 column tile
            pl.BlockSpec((tm, K), lambda i: (i, 0)),      # x2 column tile
        ],
        # Full concatenated row extent, lane-dense tm-wide column slab:
        # unmasked vst, double-buffered across grid steps.
        out_specs=pl.BlockSpec((out_rows, tm), lambda i: (0, i)),
    )

    bytes_accessed = itemsize * (M * (N + K) + out_rows * M)

    return pl.pallas_call(
        _cat_transpose_kernel,
        out_shape=jax.ShapeDtypeStruct((out_rows, M), x1.dtype),
        grid_spec=grid_spec,
        compiler_params=pltpu.CompilerParams(
            dimension_semantics=("parallel",),            # megacore sharding on v7x
            vmem_limit_bytes=_VMEM_LIMIT_BYTES,
        ),
        cost_estimate=pl.CostEstimate(
            flops=0, transcendentals=0, bytes_accessed=bytes_accessed),
    )(x1, x2)


if __name__ == "__main__":
    key = jax.random.PRNGKey(0)
    k1, k2, k3, k4 = jax.random.split(key, 4)

    # 1) Module-consistent small shapes (x2 promoted from 1-D (3,) to 2-D (M, K)).
    x1 = jax.random.normal(k1, (4, 3), dtype=jnp.float32)
    x2 = jax.random.normal(k2, (4, 2), dtype=jnp.float32)
    ref = _xla_cat_transpose(x1, x2)

    # Default dispatch (tiny -> XLA fast path).
    out_fast = jax.block_until_ready(cat_transpose(x1, x2))
    assert out_fast.shape == ref.shape, (out_fast.shape, ref.shape)
    assert jnp.allclose(out_fast, ref), "mismatch vs reference (fast path)"

    # Same tiny shapes forced through the Pallas kernel (full-extent block).
    out_small = jax.block_until_ready(cat_transpose(x1, x2, force_pallas=True))
    assert out_small.shape == ref.shape, (out_small.shape, ref.shape)
    assert jnp.allclose(out_small, ref), "mismatch vs reference (small pallas)"

    # 2) Tiled sanity check: grid > 1, 128-aligned lane tiles, aligned concat
    #    boundaries (K=16, K+N=40 multiples of 8).
    M2_, N2_, K2_ = 512, 24, 16
    y1 = jax.random.normal(k3, (M2_, N2_), dtype=jnp.float32)
    y2 = jax.random.normal(k4, (M2_, K2_), dtype=jnp.float32)
    ref2 = _xla_cat_transpose(y1, y2)

    out2 = jax.block_until_ready(cat_transpose(y1, y2, tm=128))     # 4 grid steps
    assert out2.shape == ref2.shape, (out2.shape, ref2.shape)
    assert jnp.allclose(out2, ref2), "mismatch vs reference (tm=128)"

    out2b = jax.block_until_ready(cat_transpose(y1, y2))            # auto-picked tm
    assert jnp.allclose(out2b, ref2), "mismatch vs reference (auto tm)"

    # 3) Odd (non-multiple-of-8) concat boundaries + partial last column tile.
    M3_, N3_, K3_ = 300, 5, 3
    z1 = jax.random.normal(k1, (M3_, N3_), dtype=jnp.float32)
    z2 = jax.random.normal(k2, (M3_, K3_), dtype=jnp.float32)
    ref3 = _xla_cat_transpose(z1, z2)
    out3 = jax.block_until_ready(cat_transpose(z1, z2, force_pallas=True))
    assert out3.shape == ref3.shape, (out3.shape, ref3.shape)
    assert jnp.allclose(out3, ref3), "mismatch vs reference (odd boundaries)"

    print("KERNEL_OK")
</pallas_src>

<mosaic_0001>
module attributes {stable_mosaic.version = 11 : i64} {
  func.func @_cat_transpose_kernel(%arg0: i32, %arg1: memref<4x3xf32, #tpu.memory_space<vmem>>, %arg2: memref<4x2xf32, #tpu.memory_space<vmem>>, %arg3: memref<8x4xf32, #tpu.memory_space<vmem>>) attributes {dimension_semantics = [#tpu.dimension_semantics<parallel>], iteration_bounds = array<i64: 1>, scalar_prefetch = 0 : i64, scratch_operands = 0 : i64, tpu.core_type = #tpu.core_type<tc>, window_params = [{transform_indices = @transform_0, window_bounds = array<i64: 4, 3>}, {transform_indices = @transform_1, window_bounds = array<i64: 4, 2>}, {transform_indices = @transform_2, window_bounds = array<i64: 8, 4>}]} {
    %c0 = arith.constant 0 : index
    %c0_0 = arith.constant 0 : index
    %0 = vector.load %arg1[%c0, %c0_0] : memref<4x3xf32, #tpu.memory_space<vmem>>, vector<4x3xf32>
    %1 = tpu.transpose %0, [1, 0] : vector<4x3xf32> -> vector<3x4xf32>
    %c0_1 = arith.constant 0 : index
    %c0_2 = arith.constant 0 : index
    %2 = vector.load %arg2[%c0_1, %c0_2] : memref<4x2xf32, #tpu.memory_space<vmem>>, vector<4x2xf32>
    %3 = tpu.transpose %2, [1, 0] : vector<4x2xf32> -> vector<2x4xf32>
    %4 = tpu.concatenate %3, %1, %1 in 0 : vector<2x4xf32>, vector<3x4xf32>, vector<3x4xf32> -> vector<8x4xf32>
    %c0_3 = arith.constant 0 : index
    %c0_4 = arith.constant 0 : index
    %5 = vector.load %arg3[%c0_3, %c0_4] : memref<8x4xf32, #tpu.memory_space<vmem>>, vector<8x4xf32>
    tpu.vector_store %arg3[%c0_3, %c0_4], %4 {strides = array<i32>} : memref<8x4xf32, #tpu.memory_space<vmem>>, vector<8x4xf32>,
    return
  }
  func.func @transform_0(%arg0: i32) -> (i32, i32) {
    %c0_i32 = arith.constant 0 : i32
    %c0_i32_0 = arith.constant 0 : i32
    return %arg0, %c0_i32 : i32, i32
  }
  func.func @transform_1(%arg0: i32) -> (i32, i32) {
    %c0_i32 = arith.constant 0 : i32
    %c0_i32_0 = arith.constant 0 : i32
    return %arg0, %c0_i32 : i32, i32
  }
  func.func @transform_2(%arg0: i32) -> (i32, i32) {
    %c0_i32 = arith.constant 0 : i32
    %c0_i32_0 = arith.constant 0 : i32
    return %c0_i32, %arg0 : i32, i32
  }
}

</mosaic_0001>

<llo_original>
// kernel: tpu_custom_call.1
$region0: #{tpu_custom_call.1}
  #allocation0 [shape = 'u32[]', space=smem, size = 0x4, offset = 0x4, fixed_abs, tag = 'smem constant byte address 0x4 - core index']
  #allocation1 [shape = 'u32[144,128]{1,0:T(1,128)}', space=vmem, size = 0x12000, scoped, tag = 'internal scratch']
  %s0 = inlined_call_operand.vmem [shape: f32[4,3], index: 0, kind: input, shape index: {}]
  %s1 = inlined_call_operand.vmem [shape: f32[4,2], index: 1, kind: input, shape index: {}]
  %s2 = inlined_call_operand.vmem [shape: f32[8,4], index: 2, kind: output, shape index: {}]
  %s3 = sld [smem:[#allocation0]]
  $region18: #{tpu_custom_call.1} parent=0
    _
  %s5 = ssub.s32 1, %s3
  %s6 = scalar_select 0, %s5, %s3
  // Predicated region
  $region2: #{tpu_custom_call.1} parent=0 // pred_check
    _
  $region3: #{tpu_custom_call.1} parent=0 // pred_check_branch
    %8 = sbr.rel (0) target = $region5
  $region4: #{tpu_custom_call.1} parent=0 // pred_region
    _
  $region5: #{tpu_custom_call.1} parent=0 // pred_fallthru
    _
  // Predicated region
  $region6: #{tpu_custom_call.1} parent=0 // pred_check
    _
  $region7: #{tpu_custom_call.1} parent=0 // pred_check_branch
    %10 = sbr.rel (0) target = $region9
  $region8: #{tpu_custom_call.1} parent=0 // pred_region
    _
  $region9: #{tpu_custom_call.1} parent=0 // pred_fallthru
    _
  %v11 = vld [vmem:[%s0] sm:$0xf]
  %12 = vxpose.xlu0.b32.start [1/16] %v11, 128
  %13 = vxpose.xlu0.b32.cont [2/16] 0.0, 128
  %14 = vxpose.xlu0.b32.cont [3/16] 0.0, 128
  %15 = vxpose.xlu0.b32.cont [4/16] 0.0, 128
  %16 = vxpose.xlu0.b32.cont [5/16] 0.0, 128
  %17 = vxpose.xlu0.b32.cont [6/16] 0.0, 128
  %18 = vxpose.xlu0.b32.cont [7/16] 0.0, 128
  %19 = vxpose.xlu0.b32.cont [8/16] 0.0, 128
  %20 = vxpose.xlu0.b32.cont [9/16] 0.0, 128
  %21 = vxpose.xlu0.b32.cont [10/16] 0.0, 128
  %22 = vxpose.xlu0.b32.cont [11/16] 0.0, 128
  %23 = vxpose.xlu0.b32.cont [12/16] 0.0, 128
  %24 = vxpose.xlu0.b32.cont [13/16] 0.0, 128
  %25 = vxpose.xlu0.b32.cont [14/16] 0.0, 128
  %26 = vxpose.xlu0.b32.cont [15/16] 0.0, 128
  %27 = vxpose.xlu0.b32.end [16/16] 0.0, 128
  %v28 = vpop.trf.xlu0
  %v29 = vpop.trf.xlu0
  %v30 = vpop.trf.xlu0
  %v31 = vpop.trf.xlu0
  %v32 = vpop.trf.xlu0
  %v33 = vpop.trf.xlu0
  %v34 = vpop.trf.xlu0
  %v35 = vpop.trf.xlu0
  %v36 = vpop.trf.xlu0
  %v37 = vpop.trf.xlu0
  %v38 = vpop.trf.xlu0
  %v39 = vpop.trf.xlu0
  %v40 = vpop.trf.xlu0
  %v41 = vpop.trf.xlu0
  %v42 = vpop.trf.xlu0
  %v43 = vpop.trf.xlu0
  %v44 = vld [vmem:[%s1] sm:$0xf]
  %45 = vxpose.xlu0.b32.start [1/16] %v44, 128
  %46 = vxpose.xlu0.b32.cont [2/16] 0.0, 128
  %47 = vxpose.xlu0.b32.cont [3/16] 0.0, 128
  %48 = vxpose.xlu0.b32.cont [4/16] 0.0, 128
  %49 = vxpose.xlu0.b32.cont [5/16] 0.0, 128
  %50 = vxpose.xlu0.b32.cont [6/16] 0.0, 128
  %51 = vxpose.xlu0.b32.cont [7/16] 0.0, 128
  %52 = vxpose.xlu0.b32.cont [8/16] 0.0, 128
  %53 = vxpose.xlu0.b32.cont [9/16] 0.0, 128
  %54 = vxpose.xlu0.b32.cont [10/16] 0.0, 128
  %55 = vxpose.xlu0.b32.cont [11/16] 0.0, 128
  %56 = vxpose.xlu0.b32.cont [12/16] 0.0, 128
  %57 = vxpose.xlu0.b32.cont [13/16] 0.0, 128
  %58 = vxpose.xlu0.b32.cont [14/16] 0.0, 128
  %59 = vxpose.xlu0.b32.cont [15/16] 0.0, 128
  %60 = vxpose.xlu0.b32.end [16/16] 0.0, 128
  %v61 = vpop.trf.xlu0
  %v62 = vpop.trf.xlu0
  %v63 = vpop.trf.xlu0
  %v64 = vpop.trf.xlu0
  %v65 = vpop.trf.xlu0
  %v66 = vpop.trf.xlu0
  %v67 = vpop.trf.xlu0
  %v68 = vpop.trf.xlu0
  %v69 = vpop.trf.xlu0
  %v70 = vpop.trf.xlu0
  %v71 = vpop.trf.xlu0
  %v72 = vpop.trf.xlu0
  %v73 = vpop.trf.xlu0
  %v74 = vpop.trf.xlu0
  %v75 = vpop.trf.xlu0
  %v76 = vpop.trf.xlu0
  %v78 = vrot.slane %v28, 6
  %v80 = vrot.slane %v28, 3
  %vm82 = vcmask 1041408
  %v83 = vsel %vm82, %v61, %v78
  %vm84 = vcmask 1044480
  %v85 = vsel %vm84, %v83, %v80
  %vm86 = vcmask 31744
  %87 = vst.msk [vmem:[%s2] sm:$0xff] %vm86, %v85
  // Predicated region
  $region10: #{tpu_custom_call.1} parent=0 // pred_check
    _
  $region11: #{tpu_custom_call.1} parent=0 // pred_check_branch
    %89 = sbr.rel (0) target = $region13
  $region12: #{tpu_custom_call.1} parent=0 // pred_region
    _
  $region13: #{tpu_custom_call.1} parent=0 // pred_fallthru
    _
  // Predicated region
  $region14: #{tpu_custom_call.1} parent=0 // pred_check
    _
  $region15: #{tpu_custom_call.1} parent=0 // pred_check_branch
    %91 = sbr.rel (0) target = $region17
  $region16: #{tpu_custom_call.1} parent=0 // pred_region
    _
  $region17: #{tpu_custom_call.1} parent=0 // pred_fallthru
    _

</llo_original>
